<compile_context>
chip_gen: v5e
topology: v5e:2x2
jax: 0.10.0
libtpu: 0.0.40
codegen_flags: <defaults>
</compile_context>

<pallas_src>
import functools

import jax
import jax.numpy as jnp
from jax.experimental import pallas as pl
from jax.experimental.pallas import tpu as pltpu


def _cdiv(a, b):
    return (a + b - 1) // b


def _round_up(x, m):
    return _cdiv(x, m) * m


def _weighted_facet_sum(x_t, n_facet, emb_dim):
    """One side (user or item).

    x_t: (n_facet * emb_dim, TM) f32 block with the example axis on lanes, so
    every op below is lane-parallel over TM examples at once.
    Returns sum_f (softmax(X X^T) X)[f] per example, shape (emb_dim, TM).
    """
    F, D = n_facet, emb_dim
    # Per-facet (D, TM) slabs; static, sublane-aligned slices.
    fac = [x_t[f * D:(f + 1) * D, :] for f in range(F)]

    # Gram entries gram[f][g][m] = <x_f, x_g> per example  -> (1, TM) each.
    # Symmetric: compute only the upper triangle (F*(F+1)/2 sublane reductions).
    gram = [[None] * F for _ in range(F)]
    for f in range(F):
        for g in range(f, F):
            v = jnp.sum(fac[f] * fac[g], axis=0, keepdims=True)   # (1, TM)
            gram[f][g] = v
            gram[g][f] = v

    # Row softmax over g, accumulating only the column sums w[g] = sum_f P[f,g].
    # Each row is packed into a sublane-dense (F, TM) array so the
    # max / exp / sum / scale chain runs on packed vregs rather than F*F
    # separate (1, TM) ops (perf review: stop wasting 7/8 of VPU/EUP width).
    w = None                                                   # (F, TM)
    for f in range(F):
        row = jnp.concatenate(gram[f], axis=0)                 # (F, TM), packed
        m = jnp.max(row, axis=0, keepdims=True)                # (1, TM)
        e = jnp.exp(row - m)                                   # (F, TM): packed exp
        denom = jnp.sum(e, axis=0, keepdims=True)              # (1, TM)
        # EUP approximate reciprocal (keeps the divide off the VALU) plus one
        # Newton step so accuracy stays at ~f32 level.
        r = pl.reciprocal(denom, approx=True)
        r = r * (2.0 - denom * r)
        p = e * r                                              # (F, TM)
        w = p if w is None else w + p

    # Weighted facet sum: s[d, m] = sum_g w[g, m] * x[g, d, m]   -> (D, TM)
    s = fac[0] * w[0:1, :]
    for g in range(1, F):
        s = s + fac[g] * w[g:g + 1, :]
    return s


def _user_item_attention_kernel(u_ref, i_ref, o_ref, *, n_facet, emb_dim):
    # u_ref, i_ref: (tile_m, F*D) natural-layout blocks;  o_ref: (1, tile_m).
    # In-kernel transpose to the lane-dense compute layout (examples on the
    # 128-lane axis), replacing the old wrapper-side XLA transpose that cost a
    # full extra HBM pass over both inputs.  tile_m is always a multiple of 128
    # so both transposes are fully (8,128)-aligned; the item-side transpose is
    # independent of the user-side math so the scheduler can overlap it.
    # If profiling ever shows the XLU as the critical slot, route this through
    # the (otherwise idle) MXU via an identity matmul instead.
    u_t = jnp.transpose(u_ref[...].astype(jnp.float32))       # (F*D, tile_m)
    s_u = _weighted_facet_sum(u_t, n_facet, emb_dim)           # (D, tile_m)
    i_t = jnp.transpose(i_ref[...].astype(jnp.float32))
    s_i = _weighted_facet_sum(i_t, n_facet, emb_dim)
    score = jnp.sum(s_u * s_i, axis=0, keepdims=True)          # (1, tile_m), lane-dense
    o_ref[...] = score.astype(o_ref.dtype)


def _choose_tile_m(m_eff, tile_m):
    """Lane-aligned tile size: multiple of 128, capped at `tile_m`, and sized
    so the 1-D grid has ~>=8 steps (pipeline depth + v7x dual-TC sharding)."""
    cap = max(128, (tile_m // 128) * 128)
    want = _round_up(_cdiv(m_eff, 8), 128)
    return max(128, min(cap, want))


def user_item_attention(user_emb, item_emb, emb_dim, n_facet, *, tile_m=2048):
    """user_emb, item_emb: (B, N, n_facet * emb_dim)  ->  (B, N) f32 scores."""
    B, N, FD = user_emb.shape
    assert FD == emb_dim * n_facet, "last dim must equal n_facet * emb_dim"
    assert item_emb.shape == user_emb.shape
    M = B * N

    # Natural layout (M, F*D): leading-dim reshape only (free, no HBM pass).
    u2 = user_emb.reshape(M, FD)
    i2 = item_emb.reshape(M, FD)

    # Only tiny inputs get zero-padded (keeps the single block (8,128)-aligned
    # for the in-kernel transpose; cost is negligible at this size).  Larger
    # ragged M uses a cdiv grid with a partially-valid last block instead of a
    # jnp.pad HBM copy.  Padded columns give a uniform softmax (no NaN) and are
    # dropped by the final [:M] slice.
    if M < 128:
        u2 = jnp.pad(u2, ((0, 128 - M), (0, 0)))
        i2 = jnp.pad(i2, ((0, 128 - M), (0, 0)))
        m_eff = 128
    else:
        m_eff = M

    tm = _choose_tile_m(m_eff, tile_m)
    grid_m = _cdiv(m_eff, tm)

    kernel = functools.partial(
        _user_item_attention_kernel, n_facet=n_facet, emb_dim=emb_dim)

    out = pl.pallas_call(
        kernel,
        out_shape=jax.ShapeDtypeStruct((1, m_eff), jnp.float32),
        grid_spec=pltpu.PrefetchScalarGridSpec(
            num_scalar_prefetch=0,
            grid=(grid_m,),
            in_specs=[
                # Natural-layout (tm, FD) blocks; if profiling shows exposed
                # DMA, add pipeline_mode=pl.Buffered(3) here rather than
                # shrinking the tile.
                pl.BlockSpec((tm, FD), lambda m: (m, 0)),
                pl.BlockSpec((tm, FD), lambda m: (m, 0)),
            ],
            out_specs=pl.BlockSpec((1, tm), lambda m: (0, m)),
        ),
        compiler_params=pltpu.CompilerParams(
            dimension_semantics=("parallel",)),
    )(u2, i2)

    return out[0, :M].reshape(B, N)


def _reference_jax(user_emb, item_emb, emb_dim, n_facet):
    """Pure-JAX mirror of the PyTorch forward, for validation."""
    B, N, _ = user_emb.shape
    u = user_emb.reshape(B, N, n_facet, emb_dim)
    i = item_emb.reshape(B, N, n_facet, emb_dim)

    def attend(x):
        p = jnp.einsum("bnfd,bngd->bnfg", x, x)
        p = jax.nn.softmax(p, axis=-1)
        return jnp.einsum("bnfg,bngd->bnfd", p, x)

    uc, ic = attend(u), attend(i)
    ui = jnp.einsum("bnfd,bngd->bnfg", uc, ic)
    return jnp.sum(ui.reshape(B, N, n_facet * n_facet), axis=2)


if __name__ == "__main__":
    # Small shapes consistent with the module: B=2, n_with_neg=8, n_facet=4, emb_dim=32.
    B, N, n_facet, emb_dim = 2, 8, 4, 32

    key = jax.random.PRNGKey(0)
    k_u, k_i = jax.random.split(key, 2)
    user_emb = jax.random.normal(k_u, (B, N, n_facet * emb_dim), dtype=jnp.float32)
    item_emb = jax.random.normal(k_i, (B, N, n_facet * emb_dim), dtype=jnp.float32)

    out = user_item_attention(user_emb, item_emb, emb_dim, n_facet)
    out = jax.block_until_ready(out)

    ref = _reference_jax(user_emb, item_emb, emb_dim, n_facet)
    assert out.shape == (B, N)
    # Tolerance slightly loosened vs 1e-4: EUP approx-reciprocal (+ Newton step)
    # in the softmax denominator and fp reassociation from the algebraic
    # simplification.
    assert jnp.allclose(out, ref, rtol=1e-3, atol=1e-2), \
        "Pallas output mismatch vs reference"

    print("KERNEL_OK")
</pallas_src>

<mosaic_0001>
module attributes {stable_mosaic.version = 11 : i64} {
  func.func @_user_item_attention_kernel(%arg0: i32, %arg1: memref<128x128xf32, #tpu.memory_space<vmem>>, %arg2: memref<128x128xf32, #tpu.memory_space<vmem>>, %arg3: memref<1x128xf32, #tpu.memory_space<vmem>>) attributes {dimension_semantics = [#tpu.dimension_semantics<parallel>], iteration_bounds = array<i64: 1>, scalar_prefetch = 0 : i64, scratch_operands = 0 : i64, tpu.core_type = #tpu.core_type<tc>, window_params = [{transform_indices = @transform_0, window_bounds = array<i64: 128, 128>}, {transform_indices = @transform_1, window_bounds = array<i64: 128, 128>}, {transform_indices = @transform_2, window_bounds = array<i64: 1, 128>}]} {
    %c0 = arith.constant 0 : index
    %c0_0 = arith.constant 0 : index
    %0 = vector.load %arg1[%c0, %c0_0] : memref<128x128xf32, #tpu.memory_space<vmem>>, vector<128x128xf32>
    %1 = tpu.transpose %0, [1, 0] : vector<128x128xf32> -> vector<128x128xf32>
    %2 = vector.extract_strided_slice %1 {offsets = [0, 0], sizes = [32, 128], strides = [1, 1]} : vector<128x128xf32> to vector<32x128xf32>
    %3 = vector.extract_strided_slice %1 {offsets = [32, 0], sizes = [32, 128], strides = [1, 1]} : vector<128x128xf32> to vector<32x128xf32>
    %4 = vector.extract_strided_slice %1 {offsets = [64, 0], sizes = [32, 128], strides = [1, 1]} : vector<128x128xf32> to vector<32x128xf32>
    %5 = vector.extract_strided_slice %1 {offsets = [96, 0], sizes = [32, 128], strides = [1, 1]} : vector<128x128xf32> to vector<32x128xf32>
    %6 = arith.mulf %2, %2 : vector<32x128xf32>
    %cst = arith.constant dense<0.000000e+00> : vector<128xf32>
    %7 = vector.multi_reduction <add>, %6, %cst [0] : vector<32x128xf32> to vector<128xf32>
    %8 = vector.shape_cast %7 : vector<128xf32> to vector<1x128xf32>
    %9 = arith.mulf %2, %3 : vector<32x128xf32>
    %cst_1 = arith.constant dense<0.000000e+00> : vector<128xf32>
    %10 = vector.multi_reduction <add>, %9, %cst_1 [0] : vector<32x128xf32> to vector<128xf32>
    %11 = vector.shape_cast %10 : vector<128xf32> to vector<1x128xf32>
    %12 = arith.mulf %2, %4 : vector<32x128xf32>
    %cst_2 = arith.constant dense<0.000000e+00> : vector<128xf32>
    %13 = vector.multi_reduction <add>, %12, %cst_2 [0] : vector<32x128xf32> to vector<128xf32>
    %14 = vector.shape_cast %13 : vector<128xf32> to vector<1x128xf32>
    %15 = arith.mulf %2, %5 : vector<32x128xf32>
    %cst_3 = arith.constant dense<0.000000e+00> : vector<128xf32>
    %16 = vector.multi_reduction <add>, %15, %cst_3 [0] : vector<32x128xf32> to vector<128xf32>
    %17 = vector.shape_cast %16 : vector<128xf32> to vector<1x128xf32>
    %18 = arith.mulf %3, %3 : vector<32x128xf32>
    %cst_4 = arith.constant dense<0.000000e+00> : vector<128xf32>
    %19 = vector.multi_reduction <add>, %18, %cst_4 [0] : vector<32x128xf32> to vector<128xf32>
    %20 = vector.shape_cast %19 : vector<128xf32> to vector<1x128xf32>
    %21 = arith.mulf %3, %4 : vector<32x128xf32>
    %cst_5 = arith.constant dense<0.000000e+00> : vector<128xf32>
    %22 = vector.multi_reduction <add>, %21, %cst_5 [0] : vector<32x128xf32> to vector<128xf32>
    %23 = vector.shape_cast %22 : vector<128xf32> to vector<1x128xf32>
    %24 = arith.mulf %3, %5 : vector<32x128xf32>
    %cst_6 = arith.constant dense<0.000000e+00> : vector<128xf32>
    %25 = vector.multi_reduction <add>, %24, %cst_6 [0] : vector<32x128xf32> to vector<128xf32>
    %26 = vector.shape_cast %25 : vector<128xf32> to vector<1x128xf32>
    %27 = arith.mulf %4, %4 : vector<32x128xf32>
    %cst_7 = arith.constant dense<0.000000e+00> : vector<128xf32>
    %28 = vector.multi_reduction <add>, %27, %cst_7 [0] : vector<32x128xf32> to vector<128xf32>
    %29 = vector.shape_cast %28 : vector<128xf32> to vector<1x128xf32>
    %30 = arith.mulf %4, %5 : vector<32x128xf32>
    %cst_8 = arith.constant dense<0.000000e+00> : vector<128xf32>
    %31 = vector.multi_reduction <add>, %30, %cst_8 [0] : vector<32x128xf32> to vector<128xf32>
    %32 = vector.shape_cast %31 : vector<128xf32> to vector<1x128xf32>
    %33 = arith.mulf %5, %5 : vector<32x128xf32>
    %cst_9 = arith.constant dense<0.000000e+00> : vector<128xf32>
    %34 = vector.multi_reduction <add>, %33, %cst_9 [0] : vector<32x128xf32> to vector<128xf32>
    %35 = vector.shape_cast %34 : vector<128xf32> to vector<1x128xf32>
    %36 = tpu.concatenate %8, %11, %14, %17 in 0 : vector<1x128xf32>, vector<1x128xf32>, vector<1x128xf32>, vector<1x128xf32> -> vector<4x128xf32>
    %cst_10 = arith.constant dense<0xFF800000> : vector<128xf32>
    %37 = vector.multi_reduction <maximumf>, %36, %cst_10 [0] : vector<4x128xf32> to vector<128xf32>
    %38 = vector.shape_cast %37 : vector<128xf32> to vector<1x128xf32>
    %39 = vector.broadcast %38 : vector<1x128xf32> to vector<4x128xf32>
    %40 = arith.subf %36, %39 : vector<4x128xf32>
    %41 = math.exp %40 : vector<4x128xf32>
    %cst_11 = arith.constant dense<0.000000e+00> : vector<128xf32>
    %42 = vector.multi_reduction <add>, %41, %cst_11 [0] : vector<4x128xf32> to vector<128xf32>
    %43 = vector.shape_cast %42 : vector<128xf32> to vector<1x128xf32>
    %44 = tpu.reciprocal %43 {approx = true} : vector<1x128xf32> -> vector<1x128xf32>
    %45 = arith.mulf %43, %44 : vector<1x128xf32>
    %cst_12 = arith.constant 2.000000e+00 : f32
    %46 = vector.broadcast %cst_12 : f32 to vector<1x128xf32>
    %47 = arith.subf %46, %45 : vector<1x128xf32>
    %48 = arith.mulf %44, %47 : vector<1x128xf32>
    %49 = vector.broadcast %48 : vector<1x128xf32> to vector<4x128xf32>
    %50 = arith.mulf %41, %49 : vector<4x128xf32>
    %51 = tpu.concatenate %11, %20, %23, %26 in 0 : vector<1x128xf32>, vector<1x128xf32>, vector<1x128xf32>, vector<1x128xf32> -> vector<4x128xf32>
    %cst_13 = arith.constant dense<0xFF800000> : vector<128xf32>
    %52 = vector.multi_reduction <maximumf>, %51, %cst_13 [0] : vector<4x128xf32> to vector<128xf32>
    %53 = vector.shape_cast %52 : vector<128xf32> to vector<1x128xf32>
    %54 = vector.broadcast %53 : vector<1x128xf32> to vector<4x128xf32>
    %55 = arith.subf %51, %54 : vector<4x128xf32>
    %56 = math.exp %55 : vector<4x128xf32>
    %cst_14 = arith.constant dense<0.000000e+00> : vector<128xf32>
    %57 = vector.multi_reduction <add>, %56, %cst_14 [0] : vector<4x128xf32> to vector<128xf32>
    %58 = vector.shape_cast %57 : vector<128xf32> to vector<1x128xf32>
    %59 = tpu.reciprocal %58 {approx = true} : vector<1x128xf32> -> vector<1x128xf32>
    %60 = arith.mulf %58, %59 : vector<1x128xf32>
    %cst_15 = arith.constant 2.000000e+00 : f32
    %61 = vector.broadcast %cst_15 : f32 to vector<1x128xf32>
    %62 = arith.subf %61, %60 : vector<1x128xf32>
    %63 = arith.mulf %59, %62 : vector<1x128xf32>
    %64 = vector.broadcast %63 : vector<1x128xf32> to vector<4x128xf32>
    %65 = arith.mulf %56, %64 : vector<4x128xf32>
    %66 = arith.addf %50, %65 : vector<4x128xf32>
    %67 = tpu.concatenate %14, %23, %29, %32 in 0 : vector<1x128xf32>, vector<1x128xf32>, vector<1x128xf32>, vector<1x128xf32> -> vector<4x128xf32>
    %cst_16 = arith.constant dense<0xFF800000> : vector<128xf32>
    %68 = vector.multi_reduction <maximumf>, %67, %cst_16 [0] : vector<4x128xf32> to vector<128xf32>
    %69 = vector.shape_cast %68 : vector<128xf32> to vector<1x128xf32>
    %70 = vector.broadcast %69 : vector<1x128xf32> to vector<4x128xf32>
    %71 = arith.subf %67, %70 : vector<4x128xf32>
    %72 = math.exp %71 : vector<4x128xf32>
    %cst_17 = arith.constant dense<0.000000e+00> : vector<128xf32>
    %73 = vector.multi_reduction <add>, %72, %cst_17 [0] : vector<4x128xf32> to vector<128xf32>
    %74 = vector.shape_cast %73 : vector<128xf32> to vector<1x128xf32>
    %75 = tpu.reciprocal %74 {approx = true} : vector<1x128xf32> -> vector<1x128xf32>
    %76 = arith.mulf %74, %75 : vector<1x128xf32>
    %cst_18 = arith.constant 2.000000e+00 : f32
    %77 = vector.broadcast %cst_18 : f32 to vector<1x128xf32>
    %78 = arith.subf %77, %76 : vector<1x128xf32>
    %79 = arith.mulf %75, %78 : vector<1x128xf32>
    %80 = vector.broadcast %79 : vector<1x128xf32> to vector<4x128xf32>
    %81 = arith.mulf %72, %80 : vector<4x128xf32>
    %82 = arith.addf %66, %81 : vector<4x128xf32>
    %83 = tpu.concatenate %17, %26, %32, %35 in 0 : vector<1x128xf32>, vector<1x128xf32>, vector<1x128xf32>, vector<1x128xf32> -> vector<4x128xf32>
    %cst_19 = arith.constant dense<0xFF800000> : vector<128xf32>
    %84 = vector.multi_reduction <maximumf>, %83, %cst_19 [0] : vector<4x128xf32> to vector<128xf32>
    %85 = vector.shape_cast %84 : vector<128xf32> to vector<1x128xf32>
    %86 = vector.broadcast %85 : vector<1x128xf32> to vector<4x128xf32>
    %87 = arith.subf %83, %86 : vector<4x128xf32>
    %88 = math.exp %87 : vector<4x128xf32>
    %cst_20 = arith.constant dense<0.000000e+00> : vector<128xf32>
    %89 = vector.multi_reduction <add>, %88, %cst_20 [0] : vector<4x128xf32> to vector<128xf32>
    %90 = vector.shape_cast %89 : vector<128xf32> to vector<1x128xf32>
    %91 = tpu.reciprocal %90 {approx = true} : vector<1x128xf32> -> vector<1x128xf32>
    %92 = arith.mulf %90, %91 : vector<1x128xf32>
    %cst_21 = arith.constant 2.000000e+00 : f32
    %93 = vector.broadcast %cst_21 : f32 to vector<1x128xf32>
    %94 = arith.subf %93, %92 : vector<1x128xf32>
    %95 = arith.mulf %91, %94 : vector<1x128xf32>
    %96 = vector.broadcast %95 : vector<1x128xf32> to vector<4x128xf32>
    %97 = arith.mulf %88, %96 : vector<4x128xf32>
    %98 = arith.addf %82, %97 : vector<4x128xf32>
    %99 = vector.extract_strided_slice %98 {offsets = [0, 0], sizes = [1, 128], strides = [1, 1]} : vector<4x128xf32> to vector<1x128xf32>
    %100 = vector.broadcast %99 : vector<1x128xf32> to vector<32x128xf32>
    %101 = arith.mulf %2, %100 : vector<32x128xf32>
    %102 = vector.extract_strided_slice %98 {offsets = [1, 0], sizes = [1, 128], strides = [1, 1]} : vector<4x128xf32> to vector<1x128xf32>
    %103 = vector.broadcast %102 : vector<1x128xf32> to vector<32x128xf32>
    %104 = arith.mulf %3, %103 : vector<32x128xf32>
    %105 = arith.addf %101, %104 : vector<32x128xf32>
    %106 = vector.extract_strided_slice %98 {offsets = [2, 0], sizes = [1, 128], strides = [1, 1]} : vector<4x128xf32> to vector<1x128xf32>
    %107 = vector.broadcast %106 : vector<1x128xf32> to vector<32x128xf32>
    %108 = arith.mulf %4, %107 : vector<32x128xf32>
    %109 = arith.addf %105, %108 : vector<32x128xf32>
    %110 = vector.extract_strided_slice %98 {offsets = [3, 0], sizes = [1, 128], strides = [1, 1]} : vector<4x128xf32> to vector<1x128xf32>
    %111 = vector.broadcast %110 : vector<1x128xf32> to vector<32x128xf32>
    %112 = arith.mulf %5, %111 : vector<32x128xf32>
    %113 = arith.addf %109, %112 : vector<32x128xf32>
    %c0_22 = arith.constant 0 : index
    %c0_23 = arith.constant 0 : index
    %114 = vector.load %arg2[%c0_22, %c0_23] : memref<128x128xf32, #tpu.memory_space<vmem>>, vector<128x128xf32>
    %115 = tpu.transpose %114, [1, 0] : vector<128x128xf32> -> vector<128x128xf32>
    %116 = vector.extract_strided_slice %115 {offsets = [0, 0], sizes = [32, 128], strides = [1, 1]} : vector<128x128xf32> to vector<32x128xf32>
    %117 = vector.extract_strided_slice %115 {offsets = [32, 0], sizes = [32, 128], strides = [1, 1]} : vector<128x128xf32> to vector<32x128xf32>
    %118 = vector.extract_strided_slice %115 {offsets = [64, 0], sizes = [32, 128], strides = [1, 1]} : vector<128x128xf32> to vector<32x128xf32>
    %119 = vector.extract_strided_slice %115 {offsets = [96, 0], sizes = [32, 128], strides = [1, 1]} : vector<128x128xf32> to vector<32x128xf32>
    %120 = arith.mulf %116, %116 : vector<32x128xf32>
    %cst_24 = arith.constant dense<0.000000e+00> : vector<128xf32>
    %121 = vector.multi_reduction <add>, %120, %cst_24 [0] : vector<32x128xf32> to vector<128xf32>
    %122 = vector.shape_cast %121 : vector<128xf32> to vector<1x128xf32>
    %123 = arith.mulf %116, %117 : vector<32x128xf32>
    %cst_25 = arith.constant dense<0.000000e+00> : vector<128xf32>
    %124 = vector.multi_reduction <add>, %123, %cst_25 [0] : vector<32x128xf32> to vector<128xf32>
    %125 = vector.shape_cast %124 : vector<128xf32> to vector<1x128xf32>
    %126 = arith.mulf %116, %118 : vector<32x128xf32>
    %cst_26 = arith.constant dense<0.000000e+00> : vector<128xf32>
    %127 = vector.multi_reduction <add>, %126, %cst_26 [0] : vector<32x128xf32> to vector<128xf32>
    %128 = vector.shape_cast %127 : vector<128xf32> to vector<1x128xf32>
    %129 = arith.mulf %116, %119 : vector<32x128xf32>
    %cst_27 = arith.constant dense<0.000000e+00> : vector<128xf32>
    %130 = vector.multi_reduction <add>, %129, %cst_27 [0] : vector<32x128xf32> to vector<128xf32>
    %131 = vector.shape_cast %130 : vector<128xf32> to vector<1x128xf32>
    %132 = arith.mulf %117, %117 : vector<32x128xf32>
    %cst_28 = arith.constant dense<0.000000e+00> : vector<128xf32>
    %133 = vector.multi_reduction <add>, %132, %cst_28 [0] : vector<32x128xf32> to vector<128xf32>
    %134 = vector.shape_cast %133 : vector<128xf32> to vector<1x128xf32>
    %135 = arith.mulf %117, %118 : vector<32x128xf32>
    %cst_29 = arith.constant dense<0.000000e+00> : vector<128xf32>
    %136 = vector.multi_reduction <add>, %135, %cst_29 [0] : vector<32x128xf32> to vector<128xf32>
    %137 = vector.shape_cast %136 : vector<128xf32> to vector<1x128xf32>
    %138 = arith.mulf %117, %119 : vector<32x128xf32>
    %cst_30 = arith.constant dense<0.000000e+00> : vector<128xf32>
    %139 = vector.multi_reduction <add>, %138, %cst_30 [0] : vector<32x128xf32> to vector<128xf32>
    %140 = vector.shape_cast %139 : vector<128xf32> to vector<1x128xf32>
    %141 = arith.mulf %118, %118 : vector<32x128xf32>
    %cst_31 = arith.constant dense<0.000000e+00> : vector<128xf32>
    %142 = vector.multi_reduction <add>, %141, %cst_31 [0] : vector<32x128xf32> to vector<128xf32>
    %143 = vector.shape_cast %142 : vector<128xf32> to vector<1x128xf32>
    %144 = arith.mulf %118, %119 : vector<32x128xf32>
    %cst_32 = arith.constant dense<0.000000e+00> : vector<128xf32>
    %145 = vector.multi_reduction <add>, %144, %cst_32 [0] : vector<32x128xf32> to vector<128xf32>
    %146 = vector.shape_cast %145 : vector<128xf32> to vector<1x128xf32>
    %147 = arith.mulf %119, %119 : vector<32x128xf32>
    %cst_33 = arith.constant dense<0.000000e+00> : vector<128xf32>
    %148 = vector.multi_reduction <add>, %147, %cst_33 [0] : vector<32x128xf32> to vector<128xf32>
    %149 = vector.shape_cast %148 : vector<128xf32> to vector<1x128xf32>
    %150 = tpu.concatenate %122, %125, %128, %131 in 0 : vector<1x128xf32>, vector<1x128xf32>, vector<1x128xf32>, vector<1x128xf32> -> vector<4x128xf32>
    %cst_34 = arith.constant dense<0xFF800000> : vector<128xf32>
    %151 = vector.multi_reduction <maximumf>, %150, %cst_34 [0] : vector<4x128xf32> to vector<128xf32>
    %152 = vector.shape_cast %151 : vector<128xf32> to vector<1x128xf32>
    %153 = vector.broadcast %152 : vector<1x128xf32> to vector<4x128xf32>
    %154 = arith.subf %150, %153 : vector<4x128xf32>
    %155 = math.exp %154 : vector<4x128xf32>
    %cst_35 = arith.constant dense<0.000000e+00> : vector<128xf32>
    %156 = vector.multi_reduction <add>, %155, %cst_35 [0] : vector<4x128xf32> to vector<128xf32>
    %157 = vector.shape_cast %156 : vector<128xf32> to vector<1x128xf32>
    %158 = tpu.reciprocal %157 {approx = true} : vector<1x128xf32> -> vector<1x128xf32>
    %159 = arith.mulf %157, %158 : vector<1x128xf32>
    %cst_36 = arith.constant 2.000000e+00 : f32
    %160 = vector.broadcast %cst_36 : f32 to vector<1x128xf32>
    %161 = arith.subf %160, %159 : vector<1x128xf32>
    %162 = arith.mulf %158, %161 : vector<1x128xf32>
    %163 = vector.broadcast %162 : vector<1x128xf32> to vector<4x128xf32>
    %164 = arith.mulf %155, %163 : vector<4x128xf32>
    %165 = tpu.concatenate %125, %134, %137, %140 in 0 : vector<1x128xf32>, vector<1x128xf32>, vector<1x128xf32>, vector<1x128xf32> -> vector<4x128xf32>
    %cst_37 = arith.constant dense<0xFF800000> : vector<128xf32>
    %166 = vector.multi_reduction <maximumf>, %165, %cst_37 [0] : vector<4x128xf32> to vector<128xf32>
    %167 = vector.shape_cast %166 : vector<128xf32> to vector<1x128xf32>
    %168 = vector.broadcast %167 : vector<1x128xf32> to vector<4x128xf32>
    %169 = arith.subf %165, %168 : vector<4x128xf32>
    %170 = math.exp %169 : vector<4x128xf32>
    %cst_38 = arith.constant dense<0.000000e+00> : vector<128xf32>
    %171 = vector.multi_reduction <add>, %170, %cst_38 [0] : vector<4x128xf32> to vector<128xf32>
    %172 = vector.shape_cast %171 : vector<128xf32> to vector<1x128xf32>
    %173 = tpu.reciprocal %172 {approx = true} : vector<1x128xf32> -> vector<1x128xf32>
    %174 = arith.mulf %172, %173 : vector<1x128xf32>
    %cst_39 = arith.constant 2.000000e+00 : f32
    %175 = vector.broadcast %cst_39 : f32 to vector<1x128xf32>
    %176 = arith.subf %175, %174 : vector<1x128xf32>
    %177 = arith.mulf %173, %176 : vector<1x128xf32>
    %178 = vector.broadcast %177 : vector<1x128xf32> to vector<4x128xf32>
    %179 = arith.mulf %170, %178 : vector<4x128xf32>
    %180 = arith.addf %164, %179 : vector<4x128xf32>
    %181 = tpu.concatenate %128, %137, %143, %146 in 0 : vector<1x128xf32>, vector<1x128xf32>, vector<1x128xf32>, vector<1x128xf32> -> vector<4x128xf32>
    %cst_40 = arith.constant dense<0xFF800000> : vector<128xf32>
    %182 = vector.multi_reduction <maximumf>, %181, %cst_40 [0] : vector<4x128xf32> to vector<128xf32>
    %183 = vector.shape_cast %182 : vector<128xf32> to vector<1x128xf32>
    %184 = vector.broadcast %183 : vector<1x128xf32> to vector<4x128xf32>
    %185 = arith.subf %181, %184 : vector<4x128xf32>
    %186 = math.exp %185 : vector<4x128xf32>
    %cst_41 = arith.constant dense<0.000000e+00> : vector<128xf32>
    %187 = vector.multi_reduction <add>, %186, %cst_41 [0] : vector<4x128xf32> to vector<128xf32>
    %188 = vector.shape_cast %187 : vector<128xf32> to vector<1x128xf32>
    %189 = tpu.reciprocal %188 {approx = true} : vector<1x128xf32> -> vector<1x128xf32>
    %190 = arith.mulf %188, %189 : vector<1x128xf32>
    %cst_42 = arith.constant 2.000000e+00 : f32
    %191 = vector.broadcast %cst_42 : f32 to vector<1x128xf32>
    %192 = arith.subf %191, %190 : vector<1x128xf32>
    %193 = arith.mulf %189, %192 : vector<1x128xf32>
    %194 = vector.broadcast %193 : vector<1x128xf32> to vector<4x128xf32>
    %195 = arith.mulf %186, %194 : vector<4x128xf32>
    %196 = arith.addf %180, %195 : vector<4x128xf32>
    %197 = tpu.concatenate %131, %140, %146, %149 in 0 : vector<1x128xf32>, vector<1x128xf32>, vector<1x128xf32>, vector<1x128xf32> -> vector<4x128xf32>
    %cst_43 = arith.constant dense<0xFF800000> : vector<128xf32>
    %198 = vector.multi_reduction <maximumf>, %197, %cst_43 [0] : vector<4x128xf32> to vector<128xf32>
    %199 = vector.shape_cast %198 : vector<128xf32> to vector<1x128xf32>
    %200 = vector.broadcast %199 : vector<1x128xf32> to vector<4x128xf32>
    %201 = arith.subf %197, %200 : vector<4x128xf32>
    %202 = math.exp %201 : vector<4x128xf32>
    %cst_44 = arith.constant dense<0.000000e+00> : vector<128xf32>
    %203 = vector.multi_reduction <add>, %202, %cst_44 [0] : vector<4x128xf32> to vector<128xf32>
    %204 = vector.shape_cast %203 : vector<128xf32> to vector<1x128xf32>
    %205 = tpu.reciprocal %204 {approx = true} : vector<1x128xf32> -> vector<1x128xf32>
    %206 = arith.mulf %204, %205 : vector<1x128xf32>
    %cst_45 = arith.constant 2.000000e+00 : f32
    %207 = vector.broadcast %cst_45 : f32 to vector<1x128xf32>
    %208 = arith.subf %207, %206 : vector<1x128xf32>
    %209 = arith.mulf %205, %208 : vector<1x128xf32>
    %210 = vector.broadcast %209 : vector<1x128xf32> to vector<4x128xf32>
    %211 = arith.mulf %202, %210 : vector<4x128xf32>
    %212 = arith.addf %196, %211 : vector<4x128xf32>
    %213 = vector.extract_strided_slice %212 {offsets = [0, 0], sizes = [1, 128], strides = [1, 1]} : vector<4x128xf32> to vector<1x128xf32>
    %214 = vector.broadcast %213 : vector<1x128xf32> to vector<32x128xf32>
    %215 = arith.mulf %116, %214 : vector<32x128xf32>
    %216 = vector.extract_strided_slice %212 {offsets = [1, 0], sizes = [1, 128], strides = [1, 1]} : vector<4x128xf32> to vector<1x128xf32>
    %217 = vector.broadcast %216 : vector<1x128xf32> to vector<32x128xf32>
    %218 = arith.mulf %117, %217 : vector<32x128xf32>
    %219 = arith.addf %215, %218 : vector<32x128xf32>
    %220 = vector.extract_strided_slice %212 {offsets = [2, 0], sizes = [1, 128], strides = [1, 1]} : vector<4x128xf32> to vector<1x128xf32>
    %221 = vector.broadcast %220 : vector<1x128xf32> to vector<32x128xf32>
    %222 = arith.mulf %118, %221 : vector<32x128xf32>
    %223 = arith.addf %219, %222 : vector<32x128xf32>
    %224 = vector.extract_strided_slice %212 {offsets = [3, 0], sizes = [1, 128], strides = [1, 1]} : vector<4x128xf32> to vector<1x128xf32>
    %225 = vector.broadcast %224 : vector<1x128xf32> to vector<32x128xf32>
    %226 = arith.mulf %119, %225 : vector<32x128xf32>
    %227 = arith.addf %223, %226 : vector<32x128xf32>
    %228 = arith.mulf %113, %227 : vector<32x128xf32>
    %cst_46 = arith.constant dense<0.000000e+00> : vector<128xf32>
    %229 = vector.multi_reduction <add>, %228, %cst_46 [0] : vector<32x128xf32> to vector<128xf32>
    %230 = vector.shape_cast %229 : vector<128xf32> to vector<1x128xf32>
    %c0_47 = arith.constant 0 : index
    %c0_48 = arith.constant 0 : index
    %231 = vector.load %arg3[%c0_47, %c0_48] : memref<1x128xf32, #tpu.memory_space<vmem>>, vector<1x128xf32>
    tpu.vector_store %arg3[%c0_47, %c0_48], %230 {strides = array<i32>} : memref<1x128xf32, #tpu.memory_space<vmem>>, vector<1x128xf32>,
    return
  }
  func.func @transform_0(%arg0: i32) -> (i32, i32) {
    %c0_i32 = arith.constant 0 : i32
    %c0_i32_0 = arith.constant 0 : i32
    return %arg0, %c0_i32 : i32, i32
  }
  func.func @transform_1(%arg0: i32) -> (i32, i32) {
    %c0_i32 = arith.constant 0 : i32
    %c0_i32_0 = arith.constant 0 : i32
    return %arg0, %c0_i32 : i32, i32
  }
  func.func @transform_2(%arg0: i32) -> (i32, i32) {
    %c0_i32 = arith.constant 0 : i32
    %c0_i32_0 = arith.constant 0 : i32
    return %c0_i32, %arg0 : i32, i32
  }
}

</mosaic_0001>

<llo_original>
// kernel: tpu_custom_call.1
$region0: #{tpu_custom_call.1}
  #allocation0 [shape = 'u32[]', space=smem, size = 0x4, offset = 0x4, fixed_abs, tag = 'smem constant byte address 0x4 - core index']
  #allocation1 [shape = 'u32[72,128]{1,0:T(1,128)}', space=vmem, size = 0x9000, scoped, tag = 'internal scratch']
  %s0 = inlined_call_operand.hbm [shape: f32[128,128], index: 0, kind: input, shape index: {}]
  %s1 = inlined_call_operand.hbm [shape: f32[128,128], index: 1, kind: input, shape index: {}]
  %s2 = inlined_call_operand.hbm [shape: f32[1,128], index: 2, kind: output, shape index: {}]
  %s3 = sld [smem:[#allocation0]]
  $region26: #{tpu_custom_call.1} parent=0
    _
  %s5 = ssub.s32 1, %s3
  %s6 = scalar_select 0, %s5, %s3
  $region1: #{tpu_custom_call.1} parent=0
    #allocation2 [shape = 'u8[65536]{0}', space=vmem, size = 0x10000, scoped, tag = 'input window, operand 0, single buffered']
    #allocation3 [shape = 's32[1]{0}', space=sflag, size = 0x4, scoped, tag = 'scoped memory for tpu_custom_call.1']
    #allocation4 [shape = 's32[1]{0}', space=sflag, size = 0x4, scoped, tag = 'scoped memory for tpu_custom_call.1']
    #allocation5 [shape = 'u8[65536]{0}', space=vmem, size = 0x10000, scoped, tag = 'input window, operand 1, single buffered']
    #allocation6 [shape = 's32[1]{0}', space=sflag, size = 0x4, scoped, tag = 'scoped memory for tpu_custom_call.1']
    #allocation7 [shape = 'u8[512]{0}', space=vmem, size = 0x400, scoped, tag = 'output window, operand 0, single buffered']
    %7 = vsyncpa [#allocation3], 0
    %8 = vsyncpa [#allocation6], 0
    %9 = vsyncpa [#allocation4], 0
    // Predicated region
    $region2: #{tpu_custom_call.1} parent=1 // pred_check
      _
    $region3: #{tpu_custom_call.1} parent=1 // pred_check_branch
      %11 = sbr.rel (0) target = $region5
    $region4: #{tpu_custom_call.1} parent=1 // pred_region
      %13 = vsyncadd [#allocation3], 0
      %s14 = sshll.u32 %s0, 4
      %s15 = int_to_ptr.hbm [resolvable:$true] %s14
      %s16 = sshll.u32 [#allocation2], 4
      %s17 = int_to_ptr.vmem [resolvable:$true] %s16
      %22 = dma.hbm_to_vmem [thread:$0]  %s15, 2048, %s17, [#allocation3], 128, 128, 8
    $region5: #{tpu_custom_call.1} parent=1 // pred_fallthru
      _
    // Predicated region
    $region6: #{tpu_custom_call.1} parent=1 // pred_check
      _
    $region7: #{tpu_custom_call.1} parent=1 // pred_check_branch
      %24 = sbr.rel (0) target = $region9
    $region8: #{tpu_custom_call.1} parent=1 // pred_region
      %26 = vsyncadd [#allocation6], 0
      %s27 = sshll.u32 %s1, 4
      %s28 = int_to_ptr.hbm [resolvable:$true] %s27
      %s29 = sshll.u32 [#allocation5], 4
      %s30 = int_to_ptr.vmem [resolvable:$true] %s29
      %35 = dma.hbm_to_vmem [thread:$0]  %s28, 2048, %s30, [#allocation6], 128, 128, 8
    $region9: #{tpu_custom_call.1} parent=1 // pred_fallthru
      _
    // Predicated region
    $region10: #{tpu_custom_call.1} parent=1 // pred_check
      _
    $region11: #{tpu_custom_call.1} parent=1 // pred_check_branch
      %37 = sbr.rel (0) target = $region13
    $region12: #{tpu_custom_call.1} parent=1 // pred_region
      %39 = dma.done [#allocation3], 2048
    $region13: #{tpu_custom_call.1} parent=1 // pred_fallthru
      _
    // Predicated region
    $region14: #{tpu_custom_call.1} parent=1 // pred_check
      _
    $region15: #{tpu_custom_call.1} parent=1 // pred_check_branch
      %41 = sbr.rel (0) target = $region17
    $region16: #{tpu_custom_call.1} parent=1 // pred_region
      %43 = dma.done [#allocation6], 2048
    $region17: #{tpu_custom_call.1} parent=1 // pred_fallthru
      _
    %v44 = vld [vmem:[#allocation2] sm:$0xff]
    %v45 = vld [vmem:[#allocation2 + $0x8] sm:$0xff]
    %v46 = vld [vmem:[#allocation2 + $0x10] sm:$0xff]
    %v47 = vld [vmem:[#allocation2 + $0x18] sm:$0xff]
    %v48 = vld [vmem:[#allocation2 + $0x20] sm:$0xff]
    %v49 = vld [vmem:[#allocation2 + $0x28] sm:$0xff]
    %v50 = vld [vmem:[#allocation2 + $0x30] sm:$0xff]
    %v51 = vld [vmem:[#allocation2 + $0x38] sm:$0xff]
    %v52 = vld [vmem:[#allocation2 + $0x40] sm:$0xff]
    %v53 = vld [vmem:[#allocation2 + $0x48] sm:$0xff]
    %v54 = vld [vmem:[#allocation2 + $0x50] sm:$0xff]
    %v55 = vld [vmem:[#allocation2 + $0x58] sm:$0xff]
    %v56 = vld [vmem:[#allocation2 + $0x60] sm:$0xff]
    %v57 = vld [vmem:[#allocation2 + $0x68] sm:$0xff]
    %v58 = vld [vmem:[#allocation2 + $0x70] sm:$0xff]
    %v59 = vld [vmem:[#allocation2 + $0x78] sm:$0xff]
    %60 = vxpose.xlu0.b32.start [1/16] %v44, 128
    %61 = vxpose.xlu0.b32.cont [2/16] %v45, 128
    %62 = vxpose.xlu0.b32.cont [3/16] %v46, 128
    %63 = vxpose.xlu0.b32.cont [4/16] %v47, 128
    %64 = vxpose.xlu0.b32.cont [5/16] %v48, 128
    %65 = vxpose.xlu0.b32.cont [6/16] %v49, 128
    %66 = vxpose.xlu0.b32.cont [7/16] %v50, 128
    %67 = vxpose.xlu0.b32.cont [8/16] %v51, 128
    %68 = vxpose.xlu0.b32.cont [9/16] %v52, 128
    %69 = vxpose.xlu0.b32.cont [10/16] %v53, 128
    %70 = vxpose.xlu0.b32.cont [11/16] %v54, 128
    %71 = vxpose.xlu0.b32.cont [12/16] %v55, 128
    %72 = vxpose.xlu0.b32.cont [13/16] %v56, 128
    %73 = vxpose.xlu0.b32.cont [14/16] %v57, 128
    %74 = vxpose.xlu0.b32.cont [15/16] %v58, 128
    %75 = vxpose.xlu0.b32.end [16/16] %v59, 128
    %v76 = vpop.trf.xlu0
    %v77 = vpop.trf.xlu0
    %v78 = vpop.trf.xlu0
    %v79 = vpop.trf.xlu0
    %v80 = vpop.trf.xlu0
    %v81 = vpop.trf.xlu0
    %v82 = vpop.trf.xlu0
    %v83 = vpop.trf.xlu0
    %v84 = vpop.trf.xlu0
    %v85 = vpop.trf.xlu0
    %v86 = vpop.trf.xlu0
    %v87 = vpop.trf.xlu0
    %v88 = vpop.trf.xlu0
    %v89 = vpop.trf.xlu0
    %v90 = vpop.trf.xlu0
    %v91 = vpop.trf.xlu0
    %v92 = vmul.f32 %v76, %v76
    %v93 = vmul.f32 %v77, %v77
    %v94 = vmul.f32 %v78, %v78
    %v95 = vmul.f32 %v79, %v79
    %v96 = vadd.f32 %v92, %v93
    %v97 = vadd.f32 %v96, %v94
    %v98 = vadd.f32 %v97, %v95
    %v99 = vrot.slane %v98, 4
    %v100 = vadd.f32 %v98, %v99
    %v101 = vrot.slane %v100, 2
    %v102 = vadd.f32 %v100, %v101
    %v103 = vrot.slane %v102, 1
    %v104 = vadd.f32 %v102, %v103
    %v105 = vmul.f32 %v76, %v80
    %v106 = vmul.f32 %v77, %v81
    %v107 = vmul.f32 %v78, %v82
    %v108 = vmul.f32 %v79, %v83
    %v109 = vadd.f32 %v105, %v106
    %v110 = vadd.f32 %v109, %v107
    %v111 = vadd.f32 %v110, %v108
    %v112 = vrot.slane %v111, 4
    %v113 = vadd.f32 %v111, %v112
    %v114 = vrot.slane %v113, 2
    %v115 = vadd.f32 %v113, %v114
    %v116 = vrot.slane %v115, 1
    %v117 = vadd.f32 %v115, %v116
    %v118 = vmul.f32 %v76, %v84
    %v119 = vmul.f32 %v77, %v85
    %v120 = vmul.f32 %v78, %v86
    %v121 = vmul.f32 %v79, %v87
    %v122 = vadd.f32 %v118, %v119
    %v123 = vadd.f32 %v122, %v120
    %v124 = vadd.f32 %v123, %v121
    %v125 = vrot.slane %v124, 4
    %v126 = vadd.f32 %v124, %v125
    %v127 = vrot.slane %v126, 2
    %v128 = vadd.f32 %v126, %v127
    %v129 = vrot.slane %v128, 1
    %v130 = vadd.f32 %v128, %v129
    %v131 = vmul.f32 %v76, %v88
    %v132 = vmul.f32 %v77, %v89
    %v133 = vmul.f32 %v78, %v90
    %v134 = vmul.f32 %v79, %v91
    %v135 = vadd.f32 %v131, %v132
    %v136 = vadd.f32 %v135, %v133
    %v137 = vadd.f32 %v136, %v134
    %v138 = vrot.slane %v137, 4
    %v139 = vadd.f32 %v137, %v138
    %v140 = vrot.slane %v139, 2
    %v141 = vadd.f32 %v139, %v140
    %v142 = vrot.slane %v141, 1
    %v143 = vadd.f32 %v141, %v142
    %v144 = vmul.f32 %v80, %v80
    %v145 = vmul.f32 %v81, %v81
    %v146 = vmul.f32 %v82, %v82
    %v147 = vmul.f32 %v83, %v83
    %v148 = vadd.f32 %v144, %v145
    %v149 = vadd.f32 %v148, %v146
    %v150 = vadd.f32 %v149, %v147
    %v151 = vrot.slane %v150, 4
    %v152 = vadd.f32 %v150, %v151
    %v153 = vrot.slane %v152, 2
    %v154 = vadd.f32 %v152, %v153
    %v155 = vrot.slane %v154, 1
    %v156 = vadd.f32 %v154, %v155
    %v157 = vmul.f32 %v80, %v84
    %v158 = vmul.f32 %v81, %v85
    %v159 = vmul.f32 %v82, %v86
    %v160 = vmul.f32 %v83, %v87
    %v161 = vadd.f32 %v157, %v158
    %v162 = vadd.f32 %v161, %v159
    %v163 = vadd.f32 %v162, %v160
    %v164 = vrot.slane %v163, 4
    %v165 = vadd.f32 %v163, %v164
    %v166 = vrot.slane %v165, 2
    %v167 = vadd.f32 %v165, %v166
    %v168 = vrot.slane %v167, 1
    %v169 = vadd.f32 %v167, %v168
    %v170 = vmul.f32 %v80, %v88
    %v171 = vmul.f32 %v81, %v89
    %v172 = vmul.f32 %v82, %v90
    %v173 = vmul.f32 %v83, %v91
    %v174 = vadd.f32 %v170, %v171
    %v175 = vadd.f32 %v174, %v172
    %v176 = vadd.f32 %v175, %v173
    %v177 = vrot.slane %v176, 4
    %v178 = vadd.f32 %v176, %v177
    %v179 = vrot.slane %v178, 2
    %v180 = vadd.f32 %v178, %v179
    %v181 = vrot.slane %v180, 1
    %v182 = vadd.f32 %v180, %v181
    %v183 = vmul.f32 %v84, %v84
    %v184 = vmul.f32 %v85, %v85
    %v185 = vmul.f32 %v86, %v86
    %v186 = vmul.f32 %v87, %v87
    %v187 = vadd.f32 %v183, %v184
    %v188 = vadd.f32 %v187, %v185
    %v189 = vadd.f32 %v188, %v186
    %v190 = vrot.slane %v189, 4
    %v191 = vadd.f32 %v189, %v190
    %v192 = vrot.slane %v191, 2
    %v193 = vadd.f32 %v191, %v192
    %v194 = vrot.slane %v193, 1
    %v195 = vadd.f32 %v193, %v194
    %v196 = vmul.f32 %v84, %v88
    %v197 = vmul.f32 %v85, %v89
    %v198 = vmul.f32 %v86, %v90
    %v199 = vmul.f32 %v87, %v91
    %v200 = vadd.f32 %v196, %v197
    %v201 = vadd.f32 %v200, %v198
    %v202 = vadd.f32 %v201, %v199
    %v203 = vrot.slane %v202, 4
    %v204 = vadd.f32 %v202, %v203
    %v205 = vrot.slane %v204, 2
    %v206 = vadd.f32 %v204, %v205
    %v207 = vrot.slane %v206, 1
    %v208 = vadd.f32 %v206, %v207
    %v209 = vmul.f32 %v88, %v88
    %v210 = vmul.f32 %v89, %v89
    %v211 = vmul.f32 %v90, %v90
    %v212 = vmul.f32 %v91, %v91
    %v213 = vadd.f32 %v209, %v210
    %v214 = vadd.f32 %v213, %v211
    %v215 = vadd.f32 %v214, %v212
    %v216 = vrot.slane %v215, 4
    %v217 = vadd.f32 %v215, %v216
    %v218 = vrot.slane %v217, 2
    %v219 = vadd.f32 %v217, %v218
    %v220 = vrot.slane %v219, 1
    %v221 = vadd.f32 %v219, %v220
    %vm222 = vcmask 1040384
    %v223 = vsel %vm222, %v104, %v117
    %vm224 = vcmask 1041408
    %v225 = vsel %vm224, %v223, %v130
    %vm226 = vcmask 1042432
    %v227 = vsel %vm226, %v225, %v143
    %vm228 = vcmask 1043456
    %v229 = vsel %vm228, %v227, -inf
    %v230 = vrot.slane %v229, 4
    %v231 = vmax.f32 %v229, %v230
    %v232 = vrot.slane %v231, 2
    %v233 = vmax.f32 %v231, %v232
    %v234 = vrot.slane %v233, 1
    %v235 = vmax.f32 %v233, %v234
    %v236 = vsub.f32 %v227, %v235
    %v237 = vmul.f32 %v236, 1.442695
    %v238 = vpow.pop %v237
    %v239 = vsel %vm228, %v238, 0.0
    %v240 = vrot.slane %v239, 4
    %v241 = vadd.f32 %v239, %v240
    %v242 = vrot.slane %v241, 2
    %v243 = vadd.f32 %v241, %v242
    %v244 = vrot.slane %v243, 1
    %v245 = vadd.f32 %v243, %v244
    %v246 = vrcp.pop %v245
    %v247 = vmul.f32 %v245, %v246
    %v248 = vsub.f32 2.0, %v247
    %v249 = vmul.f32 %v246, %v248
    %v250 = vmul.f32 %v238, %v249
    %v251 = vsel %vm222, %v117, %v156
    %v252 = vsel %vm224, %v251, %v169
    %v253 = vsel %vm226, %v252, %v182
    %v254 = vsel %vm228, %v253, -inf
    %v255 = vrot.slane %v254, 4
    %v256 = vmax.f32 %v254, %v255
    %v257 = vrot.slane %v256, 2
    %v258 = vmax.f32 %v256, %v257
    %v259 = vrot.slane %v258, 1
    %v260 = vmax.f32 %v258, %v259
    %v261 = vsub.f32 %v253, %v260
    %v262 = vmul.f32 %v261, 1.442695
    %v263 = vpow.pop %v262
    %v264 = vsel %vm228, %v263, 0.0
    %v265 = vrot.slane %v264, 4
    %v266 = vadd.f32 %v264, %v265
    %v267 = vrot.slane %v266, 2
    %v268 = vadd.f32 %v266, %v267
    %v269 = vrot.slane %v268, 1
    %v270 = vadd.f32 %v268, %v269
    %v271 = vrcp.pop %v270
    %v272 = vmul.f32 %v270, %v271
    %v273 = vsub.f32 2.0, %v272
    %v274 = vmul.f32 %v271, %v273
    %v275 = vmul.f32 %v263, %v274
    %v276 = vadd.f32 %v250, %v275
    %v277 = vsel %vm222, %v130, %v169
    %v278 = vsel %vm224, %v277, %v195
    %v279 = vsel %vm226, %v278, %v208
    %v280 = vsel %vm228, %v279, -inf
    %v281 = vrot.slane %v280, 4
    %v282 = vmax.f32 %v280, %v281
    %v283 = vrot.slane %v282, 2
    %v284 = vmax.f32 %v282, %v283
    %v285 = vrot.slane %v284, 1
    %v286 = vmax.f32 %v284, %v285
    %v287 = vsub.f32 %v279, %v286
    %v288 = vmul.f32 %v287, 1.442695
    %v289 = vpow.pop %v288
    %v290 = vsel %vm228, %v289, 0.0
    %v291 = vrot.slane %v290, 4
    %v292 = vadd.f32 %v290, %v291
    %v293 = vrot.slane %v292, 2
    %v294 = vadd.f32 %v292, %v293
    %v295 = vrot.slane %v294, 1
    %v296 = vadd.f32 %v294, %v295
    %v297 = vrcp.pop %v296
    %v298 = vmul.f32 %v296, %v297
    %v299 = vsub.f32 2.0, %v298
    %v300 = vmul.f32 %v297, %v299
    %v301 = vmul.f32 %v289, %v300
    %v302 = vadd.f32 %v276, %v301
    %v303 = vsel %vm222, %v143, %v182
    %v304 = vsel %vm224, %v303, %v208
    %v305 = vsel %vm226, %v304, %v221
    %v306 = vsel %vm228, %v305, -inf
    %v307 = vrot.slane %v306, 4
    %v308 = vmax.f32 %v306, %v307
    %v309 = vrot.slane %v308, 2
    %v310 = vmax.f32 %v308, %v309
    %v311 = vrot.slane %v310, 1
    %v312 = vmax.f32 %v310, %v311
    %v313 = vsub.f32 %v305, %v312
    %v314 = vmul.f32 %v313, 1.442695
    %v315 = vpow.pop %v314
    %v316 = vsel %vm228, %v315, 0.0
    %v317 = vrot.slane %v316, 4
    %v318 = vadd.f32 %v316, %v317
    %v319 = vrot.slane %v318, 2
    %v320 = vadd.f32 %v318, %v319
    %v321 = vrot.slane %v320, 1
    %v322 = vadd.f32 %v320, %v321
    %v323 = vrcp.pop %v322
    %v324 = vmul.f32 %v322, %v323
    %v325 = vsub.f32 2.0, %v324
    %v326 = vmul.f32 %v323, %v325
    %v327 = vmul.f32 %v315, %v326
    %v328 = vadd.f32 %v302, %v327
    %v329 = vperm.slane %v328, 0
    %v330 = vmul.f32 %v76, %v329
    %v331 = vmul.f32 %v77, %v329
    %v332 = vmul.f32 %v78, %v329
    %v333 = vmul.f32 %v79, %v329
    %v334 = vperm.slane %v328, 1
    %v335 = vmul.f32 %v80, %v334
    %v336 = vmul.f32 %v81, %v334
    %v337 = vmul.f32 %v82, %v334
    %v338 = vmul.f32 %v83, %v334
    %v339 = vadd.f32 %v330, %v335
    %v340 = vadd.f32 %v331, %v336
    %v341 = vadd.f32 %v332, %v337
    %v342 = vadd.f32 %v333, %v338
    %v343 = vperm.slane %v328, 2
    %v344 = vmul.f32 %v84, %v343
    %v345 = vmul.f32 %v85, %v343
    %v346 = vmul.f32 %v86, %v343
    %v347 = vmul.f32 %v87, %v343
    %v348 = vadd.f32 %v339, %v344
    %v349 = vadd.f32 %v340, %v345
    %v350 = vadd.f32 %v341, %v346
    %v351 = vadd.f32 %v342, %v347
    %v352 = vperm.slane %v328, 3
    %v353 = vmul.f32 %v88, %v352
    %v354 = vmul.f32 %v89, %v352
    %v355 = vmul.f32 %v90, %v352
    %v356 = vmul.f32 %v91, %v352
    %v357 = vadd.f32 %v348, %v353
    %v358 = vadd.f32 %v349, %v354
    %v359 = vadd.f32 %v350, %v355
    %v360 = vadd.f32 %v351, %v356
    %v361 = vld [vmem:[#allocation5] sm:$0xff]
    %v362 = vld [vmem:[#allocation5 + $0x8] sm:$0xff]
    %v363 = vld [vmem:[#allocation5 + $0x10] sm:$0xff]
    %v364 = vld [vmem:[#allocation5 + $0x18] sm:$0xff]
    %v365 = vld [vmem:[#allocation5 + $0x20] sm:$0xff]
    %v366 = vld [vmem:[#allocation5 + $0x28] sm:$0xff]
    %v367 = vld [vmem:[#allocation5 + $0x30] sm:$0xff]
    %v368 = vld [vmem:[#allocation5 + $0x38] sm:$0xff]
    %v369 = vld [vmem:[#allocation5 + $0x40] sm:$0xff]
    %v370 = vld [vmem:[#allocation5 + $0x48] sm:$0xff]
    %v371 = vld [vmem:[#allocation5 + $0x50] sm:$0xff]
    %v372 = vld [vmem:[#allocation5 + $0x58] sm:$0xff]
    %v373 = vld [vmem:[#allocation5 + $0x60] sm:$0xff]
    %v374 = vld [vmem:[#allocation5 + $0x68] sm:$0xff]
    %v375 = vld [vmem:[#allocation5 + $0x70] sm:$0xff]
    %v376 = vld [vmem:[#allocation5 + $0x78] sm:$0xff]
    %377 = vxpose.xlu0.b32.start [1/16] %v361, 128
    %378 = vxpose.xlu0.b32.cont [2/16] %v362, 128
    %379 = vxpose.xlu0.b32.cont [3/16] %v363, 128
    %380 = vxpose.xlu0.b32.cont [4/16] %v364, 128
    %381 = vxpose.xlu0.b32.cont [5/16] %v365, 128
    %382 = vxpose.xlu0.b32.cont [6/16] %v366, 128
    %383 = vxpose.xlu0.b32.cont [7/16] %v367, 128
    %384 = vxpose.xlu0.b32.cont [8/16] %v368, 128
    %385 = vxpose.xlu0.b32.cont [9/16] %v369, 128
    %386 = vxpose.xlu0.b32.cont [10/16] %v370, 128
    %387 = vxpose.xlu0.b32.cont [11/16] %v371, 128
    %388 = vxpose.xlu0.b32.cont [12/16] %v372, 128
    %389 = vxpose.xlu0.b32.cont [13/16] %v373, 128
    %390 = vxpose.xlu0.b32.cont [14/16] %v374, 128
    %391 = vxpose.xlu0.b32.cont [15/16] %v375, 128
    %392 = vxpose.xlu0.b32.end [16/16] %v376, 128
    %v393 = vpop.trf.xlu0
    %v394 = vpop.trf.xlu0
    %v395 = vpop.trf.xlu0
    %v396 = vpop.trf.xlu0
    %v397 = vpop.trf.xlu0
    %v398 = vpop.trf.xlu0
    %v399 = vpop.trf.xlu0
    %v400 = vpop.trf.xlu0
    %v401 = vpop.trf.xlu0
    %v402 = vpop.trf.xlu0
    %v403 = vpop.trf.xlu0
    %v404 = vpop.trf.xlu0
    %v405 = vpop.trf.xlu0
    %v406 = vpop.trf.xlu0
    %v407 = vpop.trf.xlu0
    %v408 = vpop.trf.xlu0
    %v409 = vmul.f32 %v393, %v393
    %v410 = vmul.f32 %v394, %v394
    %v411 = vmul.f32 %v395, %v395
    %v412 = vmul.f32 %v396, %v396
    %v413 = vadd.f32 %v409, %v410
    %v414 = vadd.f32 %v413, %v411
    %v415 = vadd.f32 %v414, %v412
    %v416 = vrot.slane %v415, 4
    %v417 = vadd.f32 %v415, %v416
    %v418 = vrot.slane %v417, 2
    %v419 = vadd.f32 %v417, %v418
    %v420 = vrot.slane %v419, 1
    %v421 = vadd.f32 %v419, %v420
    %v422 = vmul.f32 %v393, %v397
    %v423 = vmul.f32 %v394, %v398
    %v424 = vmul.f32 %v395, %v399
    %v425 = vmul.f32 %v396, %v400
    %v426 = vadd.f32 %v422, %v423
    %v427 = vadd.f32 %v426, %v424
    %v428 = vadd.f32 %v427, %v425
    %v429 = vrot.slane %v428, 4
    %v430 = vadd.f32 %v428, %v429
    %v431 = vrot.slane %v430, 2
    %v432 = vadd.f32 %v430, %v431
    %v433 = vrot.slane %v432, 1
    %v434 = vadd.f32 %v432, %v433
    %v435 = vmul.f32 %v393, %v401
    %v436 = vmul.f32 %v394, %v402
    %v437 = vmul.f32 %v395, %v403
    %v438 = vmul.f32 %v396, %v404
    %v439 = vadd.f32 %v435, %v436
    %v440 = vadd.f32 %v439, %v437
    %v441 = vadd.f32 %v440, %v438
    %v442 = vrot.slane %v441, 4
    %v443 = vadd.f32 %v441, %v442
    %v444 = vrot.slane %v443, 2
    %v445 = vadd.f32 %v443, %v444
    %v446 = vrot.slane %v445, 1
    %v447 = vadd.f32 %v445, %v446
    %v448 = vmul.f32 %v393, %v405
    %v449 = vmul.f32 %v394, %v406
    %v450 = vmul.f32 %v395, %v407
    %v451 = vmul.f32 %v396, %v408
    %v452 = vadd.f32 %v448, %v449
    %v453 = vadd.f32 %v452, %v450
    %v454 = vadd.f32 %v453, %v451
    %v455 = vrot.slane %v454, 4
    %v456 = vadd.f32 %v454, %v455
    %v457 = vrot.slane %v456, 2
    %v458 = vadd.f32 %v456, %v457
    %v459 = vrot.slane %v458, 1
    %v460 = vadd.f32 %v458, %v459
    %v461 = vmul.f32 %v397, %v397
    %v462 = vmul.f32 %v398, %v398
    %v463 = vmul.f32 %v399, %v399
    %v464 = vmul.f32 %v400, %v400
    %v465 = vadd.f32 %v461, %v462
    %v466 = vadd.f32 %v465, %v463
    %v467 = vadd.f32 %v466, %v464
    %v468 = vrot.slane %v467, 4
    %v469 = vadd.f32 %v467, %v468
    %v470 = vrot.slane %v469, 2
    %v471 = vadd.f32 %v469, %v470
    %v472 = vrot.slane %v471, 1
    %v473 = vadd.f32 %v471, %v472
    %v474 = vmul.f32 %v397, %v401
    %v475 = vmul.f32 %v398, %v402
    %v476 = vmul.f32 %v399, %v403
    %v477 = vmul.f32 %v400, %v404
    %v478 = vadd.f32 %v474, %v475
    %v479 = vadd.f32 %v478, %v476
    %v480 = vadd.f32 %v479, %v477
    %v481 = vrot.slane %v480, 4
    %v482 = vadd.f32 %v480, %v481
    %v483 = vrot.slane %v482, 2
    %v484 = vadd.f32 %v482, %v483
    %v485 = vrot.slane %v484, 1
    %v486 = vadd.f32 %v484, %v485
    %v487 = vmul.f32 %v397, %v405
    %v488 = vmul.f32 %v398, %v406
    %v489 = vmul.f32 %v399, %v407
    %v490 = vmul.f32 %v400, %v408
    %v491 = vadd.f32 %v487, %v488
    %v492 = vadd.f32 %v491, %v489
    %v493 = vadd.f32 %v492, %v490
    %v494 = vrot.slane %v493, 4
    %v495 = vadd.f32 %v493, %v494
    %v496 = vrot.slane %v495, 2
    %v497 = vadd.f32 %v495, %v496
    %v498 = vrot.slane %v497, 1
    %v499 = vadd.f32 %v497, %v498
    %v500 = vmul.f32 %v401, %v401
    %v501 = vmul.f32 %v402, %v402
    %v502 = vmul.f32 %v403, %v403
    %v503 = vmul.f32 %v404, %v404
    %v504 = vadd.f32 %v500, %v501
    %v505 = vadd.f32 %v504, %v502
    %v506 = vadd.f32 %v505, %v503
    %v507 = vrot.slane %v506, 4
    %v508 = vadd.f32 %v506, %v507
    %v509 = vrot.slane %v508, 2
    %v510 = vadd.f32 %v508, %v509
    %v511 = vrot.slane %v510, 1
    %v512 = vadd.f32 %v510, %v511
    %v513 = vmul.f32 %v401, %v405
    %v514 = vmul.f32 %v402, %v406
    %v515 = vmul.f32 %v403, %v407
    %v516 = vmul.f32 %v404, %v408
    %v517 = vadd.f32 %v513, %v514
    %v518 = vadd.f32 %v517, %v515
    %v519 = vadd.f32 %v518, %v516
    %v520 = vrot.slane %v519, 4
    %v521 = vadd.f32 %v519, %v520
    %v522 = vrot.slane %v521, 2
    %v523 = vadd.f32 %v521, %v522
    %v524 = vrot.slane %v523, 1
    %v525 = vadd.f32 %v523, %v524
    %v526 = vmul.f32 %v405, %v405
    %v527 = vmul.f32 %v406, %v406
    %v528 = vmul.f32 %v407, %v407
    %v529 = vmul.f32 %v408, %v408
    %v530 = vadd.f32 %v526, %v527
    %v531 = vadd.f32 %v530, %v528
    %v532 = vadd.f32 %v531, %v529
    %v533 = vrot.slane %v532, 4
    %v534 = vadd.f32 %v532, %v533
    %v535 = vrot.slane %v534, 2
    %v536 = vadd.f32 %v534, %v535
    %v537 = vrot.slane %v536, 1
    %v538 = vadd.f32 %v536, %v537
    %v539 = vsel %vm222, %v421, %v434
    %v540 = vsel %vm224, %v539, %v447
    %v541 = vsel %vm226, %v540, %v460
    %v542 = vsel %vm228, %v541, -inf
    %v543 = vrot.slane %v542, 4
    %v544 = vmax.f32 %v542, %v543
    %v545 = vrot.slane %v544, 2
    %v546 = vmax.f32 %v544, %v545
    %v547 = vrot.slane %v546, 1
    %v548 = vmax.f32 %v546, %v547
    %v549 = vsub.f32 %v541, %v548
    %v550 = vmul.f32 %v549, 1.442695
    %v551 = vpow.pop %v550
    %v552 = vsel %vm228, %v551, 0.0
    %v553 = vrot.slane %v552, 4
    %v554 = vadd.f32 %v552, %v553
    %v555 = vrot.slane %v554, 2
    %v556 = vadd.f32 %v554, %v555
    %v557 = vrot.slane %v556, 1
    %v558 = vadd.f32 %v556, %v557
    %v559 = vrcp.pop %v558
    %v560 = vmul.f32 %v558, %v559
    %v561 = vsub.f32 2.0, %v560
    %v562 = vmul.f32 %v559, %v561
    %v563 = vmul.f32 %v551, %v562
    %v564 = vsel %vm222, %v434, %v473
    %v565 = vsel %vm224, %v564, %v486
    %v566 = vsel %vm226, %v565, %v499
    %v567 = vsel %vm228, %v566, -inf
    %v568 = vrot.slane %v567, 4
    %v569 = vmax.f32 %v567, %v568
    %v570 = vrot.slane %v569, 2
    %v571 = vmax.f32 %v569, %v570
    %v572 = vrot.slane %v571, 1
    %v573 = vmax.f32 %v571, %v572
    %v574 = vsub.f32 %v566, %v573
    %v575 = vmul.f32 %v574, 1.442695
    %v576 = vpow.pop %v575
    %v577 = vsel %vm228, %v576, 0.0
    %v578 = vrot.slane %v577, 4
    %v579 = vadd.f32 %v577, %v578
    %v580 = vrot.slane %v579, 2
    %v581 = vadd.f32 %v579, %v580
    %v582 = vrot.slane %v581, 1
    %v583 = vadd.f32 %v581, %v582
    %v584 = vrcp.pop %v583
    %v585 = vmul.f32 %v583, %v584
    %v586 = vsub.f32 2.0, %v585
    %v587 = vmul.f32 %v584, %v586
    %v588 = vmul.f32 %v576, %v587
    %v589 = vadd.f32 %v563, %v588
    %v590 = vsel %vm222, %v447, %v486
    %v591 = vsel %vm224, %v590, %v512
    %v592 = vsel %vm226, %v591, %v525
    %v593 = vsel %vm228, %v592, -inf
    %v594 = vrot.slane %v593, 4
    %v595 = vmax.f32 %v593, %v594
    %v596 = vrot.slane %v595, 2
    %v597 = vmax.f32 %v595, %v596
    %v598 = vrot.slane %v597, 1
    %v599 = vmax.f32 %v597, %v598
    %v600 = vsub.f32 %v592, %v599
    %v601 = vmul.f32 %v600, 1.442695
    %v602 = vpow.pop %v601
    %v603 = vsel %vm228, %v602, 0.0
    %v604 = vrot.slane %v603, 4
    %v605 = vadd.f32 %v603, %v604
    %v606 = vrot.slane %v605, 2
    %v607 = vadd.f32 %v605, %v606
    %v608 = vrot.slane %v607, 1
    %v609 = vadd.f32 %v607, %v608
    %v610 = vrcp.pop %v609
    %v611 = vmul.f32 %v609, %v610
    %v612 = vsub.f32 2.0, %v611
    %v613 = vmul.f32 %v610, %v612
    %v614 = vmul.f32 %v602, %v613
    %v615 = vadd.f32 %v589, %v614
    %v616 = vsel %vm222, %v460, %v499
    %v617 = vsel %vm224, %v616, %v525
    %v618 = vsel %vm226, %v617, %v538
    %v619 = vsel %vm228, %v618, -inf
    %v620 = vrot.slane %v619, 4
    %v621 = vmax.f32 %v619, %v620
    %v622 = vrot.slane %v621, 2
    %v623 = vmax.f32 %v621, %v622
    %v624 = vrot.slane %v623, 1
    %v625 = vmax.f32 %v623, %v624
    %v626 = vsub.f32 %v618, %v625
    %v627 = vmul.f32 %v626, 1.442695
    %v628 = vpow.pop %v627
    %v629 = vsel %vm228, %v628, 0.0
    %v630 = vrot.slane %v629, 4
    %v631 = vadd.f32 %v629, %v630
    %v632 = vrot.slane %v631, 2
    %v633 = vadd.f32 %v631, %v632
    %v634 = vrot.slane %v633, 1
    %v635 = vadd.f32 %v633, %v634
    %v636 = vrcp.pop %v635
    %v637 = vmul.f32 %v635, %v636
    %v638 = vsub.f32 2.0, %v637
    %v639 = vmul.f32 %v636, %v638
    %v640 = vmul.f32 %v628, %v639
    %v641 = vadd.f32 %v615, %v640
    %v642 = vperm.slane %v641, 0
    %v643 = vmul.f32 %v393, %v642
    %v644 = vmul.f32 %v394, %v642
    %v645 = vmul.f32 %v395, %v642
    %v646 = vmul.f32 %v396, %v642
    %v647 = vperm.slane %v641, 1
    %v648 = vmul.f32 %v397, %v647
    %v649 = vmul.f32 %v398, %v647
    %v650 = vmul.f32 %v399, %v647
    %v651 = vmul.f32 %v400, %v647
    %v652 = vadd.f32 %v643, %v648
    %v653 = vadd.f32 %v644, %v649
    %v654 = vadd.f32 %v645, %v650
    %v655 = vadd.f32 %v646, %v651
    %v656 = vperm.slane %v641, 2
    %v657 = vmul.f32 %v401, %v656
    %v658 = vmul.f32 %v402, %v656
    %v659 = vmul.f32 %v403, %v656
    %v660 = vmul.f32 %v404, %v656
    %v661 = vadd.f32 %v652, %v657
    %v662 = vadd.f32 %v653, %v658
    %v663 = vadd.f32 %v654, %v659
    %v664 = vadd.f32 %v655, %v660
    %v665 = vperm.slane %v641, 3
    %v666 = vmul.f32 %v405, %v665
    %v667 = vmul.f32 %v406, %v665
    %v668 = vmul.f32 %v407, %v665
    %v669 = vmul.f32 %v408, %v665
    %v670 = vadd.f32 %v661, %v666
    %v671 = vadd.f32 %v662, %v667
    %v672 = vadd.f32 %v663, %v668
    %v673 = vadd.f32 %v664, %v669
    %v674 = vmul.f32 %v357, %v670
    %v675 = vmul.f32 %v358, %v671
    %v676 = vmul.f32 %v359, %v672
    %v677 = vmul.f32 %v360, %v673
    %v678 = vadd.f32 %v674, %v675
    %v679 = vadd.f32 %v678, %v676
    %v680 = vadd.f32 %v679, %v677
    %v681 = vrot.slane %v680, 4
    %v682 = vadd.f32 %v680, %v681
    %v683 = vrot.slane %v682, 2
    %v684 = vadd.f32 %v682, %v683
    %v685 = vrot.slane %v684, 1
    %v686 = vadd.f32 %v684, %v685
    %687 = vst [vmem:[#allocation7] sm:$0x1] %v686
    // Predicated region
    $region18: #{tpu_custom_call.1} parent=1 // pred_check
      _
    $region19: #{tpu_custom_call.1} parent=1 // pred_check_branch
      %689 = sbr.rel (0) target = $region21
    $region20: #{tpu_custom_call.1} parent=1 // pred_region
      %691 = vsyncadd [#allocation4], 0
      %s693 = sshll.u32 [#allocation7], 4
      %s694 = int_to_ptr.vmem [resolvable:$true] %s693
      %s695 = sshll.u32 %s2, 4
      %s696 = int_to_ptr.hbm [resolvable:$true] %s695
      %698 = dma.vmem_to_hbm [thread:$0]  %s694, 16, %s696, [#allocation4]
    $region21: #{tpu_custom_call.1} parent=1 // pred_fallthru
      _
    // Predicated region
    $region22: #{tpu_custom_call.1} parent=1 // pred_check
      _
    $region23: #{tpu_custom_call.1} parent=1 // pred_check_branch
      %700 = sbr.rel (0) target = $region25
    $region24: #{tpu_custom_call.1} parent=1 // pred_region
      %702 = dma.done [#allocation4], 16
    $region25: #{tpu_custom_call.1} parent=1 // pred_fallthru
      _
    %703 = vsyncpa [#allocation3], 1
    %704 = vsyncpa [#allocation6], 1
    %705 = vsyncpa [#allocation4], 1

</llo_original>
